<compile_context>
chip_gen: v6e
topology: v6e:2x2x1
jax: 0.10.0
libtpu: 0.0.40
codegen_flags: <defaults>
</compile_context>

<pallas_src>
import jax
import jax.numpy as jnp
from jax.experimental import pallas as pl
from jax.experimental.pallas import tpu as pltpu

EMBED_DIM = 32
DEEP_LAYERS = [128, 64]
NUM_USERS = 1575
NUM_ITEMS = 5751
TAIL_DIM = 2 * EMBED_DIM + DEEP_LAYERS[1]   # 128
BATCH_TILE = 256                            # rows per grid step (multiple of 128)


def neural_fm_kernel(ue_ref, ie_ref,          # (E, TB), (E, TB)  activations, batch on lanes
                     w1_ref, b1_ref,          # (128, E), (128, 1)
                     w2_ref, b2_ref,          # (64, 128), (64, 1)
                     wt_ref,                  # (128, 1) fused tail weight [Wfm_u; Wfm_i; W3]
                     bt_ref,                  # (1, 1) SMEM scalar: bfm + b3
                     out_ref):                # (1, TB) lane-dense sigmoid output
    ue = ue_ref[...]
    ie = ie_ref[...]

    # Deep MLP on the elementwise interaction (batch on the lane axis, MXU-friendly shapes).
    inter = ue * ie                                                           # (E, TB)
    h1 = jnp.dot(w1_ref[...], inter, preferred_element_type=jnp.float32) + b1_ref[...]
    h1 = jnp.maximum(h1, 0.0)                                                 # (128, TB)
    h2 = jnp.dot(w2_ref[...], h1, preferred_element_type=jnp.float32) + b2_ref[...]
    h2 = jnp.maximum(h2, 0.0)                                                 # (64, TB)

    # Fused tail: FM linear (user + item halves) and the final deep projection collapsed into
    # a single K=128 contraction, done as a VPU multiply + XLU sublane reduce so the N=1 /
    # M=1 MXU-waste case never appears and the result is already lane-dense.
    x_tail = jnp.concatenate([ue, ie, h2], axis=0)                            # (128, TB)
    tail = jnp.sum(x_tail * wt_ref[...], axis=0, keepdims=True)               # (1, TB)
    out_ref[...] = jax.nn.sigmoid(tail + bt_ref[0, 0])


def init_params(key):
    ks = jax.random.split(key, 6)
    p = {}
    # Embedding tables: N(0, 1), like torch.nn.Embedding default.
    p["user_emb"] = jax.random.normal(ks[0], (NUM_USERS, EMBED_DIM), jnp.float32)
    p["item_emb"] = jax.random.normal(ks[1], (NUM_ITEMS, EMBED_DIM), jnp.float32)

    def linear(k, in_dim, out_dim):
        # PyTorch nn.Linear layout: W is (out, in), bias (out,), U(-1/sqrt(in), 1/sqrt(in)).
        kw, kb = jax.random.split(k)
        bound = 1.0 / (in_dim ** 0.5)
        w = jax.random.uniform(kw, (out_dim, in_dim), jnp.float32, -bound, bound)
        b = jax.random.uniform(kb, (out_dim,), jnp.float32, -bound, bound)
        return w, b

    p["wfm"], p["bfm"] = linear(ks[2], 2 * EMBED_DIM, 1)          # (1, 64), (1,)
    w1, b1 = linear(ks[3], EMBED_DIM, DEEP_LAYERS[0])             # (128, 32), (128,)
    w2, b2 = linear(ks[4], DEEP_LAYERS[0], DEEP_LAYERS[1])        # (64, 128), (64,)
    p["w1"], p["b1"] = w1, b1.reshape(-1, 1)
    p["w2"], p["b2"] = w2, b2.reshape(-1, 1)
    p["w3"], p["b3"] = linear(ks[5], DEEP_LAYERS[1], 1)           # (1, 64), (1,)
    return p


def neural_fm_forward(params, user, item, *, batch_tile=BATCH_TILE):
    # Embedding gather: pure indexing glue, left to XLA.
    # TODO(synk): fuse the row gather in-kernel once a vectorized Mosaic gather over the
    #             1575/5751-row tables is robust; a per-row DMA/loop gather loses at large batch.
    ue = jnp.take(params["user_emb"], user, axis=0)   # (B, E)
    ie = jnp.take(params["item_emb"], item, axis=0)   # (B, E)

    B = user.shape[0]
    nb = pl.cdiv(B, batch_tile)
    b_pad = nb * batch_tile

    def pad_t(x):  # (B, E) -> (E, B_pad): batch onto the lane axis (layout plumbing in XLA)
        return jnp.pad(x, ((0, b_pad - B), (0, 0))).T

    ue_t, ie_t = pad_t(ue), pad_t(ie)

    # Fused tail weight / bias (FM linear on [user, item] + final deep projection).
    w_tail = jnp.concatenate([params["wfm"].T, params["w3"].T], axis=0)   # (128, 1)
    b_tail = (params["bfm"] + params["b3"]).reshape(1, 1)                 # (1, 1) -> SMEM

    E, L1, L2 = EMBED_DIM, DEEP_LAYERS[0], DEEP_LAYERS[1]
    act_spec = pl.BlockSpec((E, batch_tile), lambda i: (0, i))
    resident = lambda shape: pl.BlockSpec(shape, lambda i: (0, 0))   # weights stay in VMEM

    flops = 2 * b_pad * (E * L1 + L1 * L2 + TAIL_DIM) + 6 * b_pad * E
    weight_bytes = 4 * (L1 * E + L1 + L2 * L1 + L2 + TAIL_DIM + 1)
    bytes_accessed = 2 * b_pad * E * 4 + weight_bytes + b_pad * 4

    out = pl.pallas_call(
        neural_fm_kernel,
        out_shape=jax.ShapeDtypeStruct((1, b_pad), jnp.float32),
        grid=(nb,),
        in_specs=[
            act_spec, act_spec,
            resident((L1, E)), resident((L1, 1)),
            resident((L2, L1)), resident((L2, 1)),
            resident((TAIL_DIM, 1)),
            pl.BlockSpec(memory_space=pltpu.MemorySpace.SMEM),      # scalar tail bias
        ],
        out_specs=pl.BlockSpec((1, batch_tile), lambda i: (0, i)),  # lane-dense output row
        compiler_params=pltpu.CompilerParams(
            dimension_semantics=("parallel",)),
        cost_estimate=pl.CostEstimate(
            flops=flops, transcendentals=b_pad, bytes_accessed=bytes_accessed),
    )(ue_t, ie_t,
      params["w1"], params["b1"],
      params["w2"], params["b2"],
      w_tail, b_tail)

    # Matches torch .squeeze(): (B,) for B > 1, scalar for B == 1.
    return jnp.squeeze(out[0, :B])


def reference_forward(params, user, item):
    ue = jnp.take(params["user_emb"], user, axis=0)
    ie = jnp.take(params["item_emb"], item, axis=0)
    fm_in = jnp.concatenate([ue, ie], axis=1)
    fm_out = fm_in @ params["wfm"].T + params["bfm"]                       # (B, 1)
    inter = ue * ie
    h1 = jnp.maximum(inter @ params["w1"].T + params["b1"].reshape(1, -1), 0.0)
    h2 = jnp.maximum(h1 @ params["w2"].T + params["b2"].reshape(1, -1), 0.0)
    deep = h2 @ params["w3"].T + params["b3"]                              # (B, 1)
    return jnp.squeeze(jax.nn.sigmoid(fm_out + deep))


if __name__ == "__main__":
    key = jax.random.PRNGKey(0)
    kp, ku, ki = jax.random.split(key, 3)
    params = init_params(kp)

    B = 8
    user = jax.random.randint(ku, (B,), 0, NUM_USERS, dtype=jnp.int32)
    item = jax.random.randint(ki, (B,), 0, NUM_ITEMS, dtype=jnp.int32)

    out = neural_fm_forward(params, user, item)
    out = jax.block_until_ready(out)

    ref = reference_forward(params, user, item)
    assert out.shape == (B,)
    # Tolerance covers the MXU's default (bf16-pass) f32 matmul rounding, which can differ
    # between the transposed in-kernel matmuls and the XLA reference matmuls.
    assert jnp.allclose(out, ref, atol=3e-3, rtol=3e-3)
    print("KERNEL_OK")
</pallas_src>

<mosaic_0001>
module attributes {stable_mosaic.version = 11 : i64} {
  func.func @neural_fm_kernel(%arg0: i32, %arg1: memref<32x256xf32, #tpu.memory_space<vmem>>, %arg2: memref<32x256xf32, #tpu.memory_space<vmem>>, %arg3: memref<128x32xf32, #tpu.memory_space<vmem>>, %arg4: memref<128x1xf32, #tpu.memory_space<vmem>>, %arg5: memref<64x128xf32, #tpu.memory_space<vmem>>, %arg6: memref<64x1xf32, #tpu.memory_space<vmem>>, %arg7: memref<128x1xf32, #tpu.memory_space<vmem>>, %arg8: memref<1x1xf32, #tpu.memory_space<smem>>, %arg9: memref<1x256xf32, #tpu.memory_space<vmem>>) attributes {dimension_semantics = [#tpu.dimension_semantics<parallel>], iteration_bounds = array<i64: 1>, scalar_prefetch = 0 : i64, scratch_operands = 0 : i64, tpu.core_type = #tpu.core_type<tc>, window_params = [{transform_indices = @transform_0, window_bounds = array<i64: 32, 256>}, {transform_indices = @transform_1, window_bounds = array<i64: 32, 256>}, {pipeline_mode = #tpu.pipeline_mode<synchronous>, transform_indices = @transform_2, window_bounds = array<i64: 128, 32>}, {pipeline_mode = #tpu.pipeline_mode<synchronous>, transform_indices = @transform_3, window_bounds = array<i64: 128, 1>}, {pipeline_mode = #tpu.pipeline_mode<synchronous>, transform_indices = @transform_4, window_bounds = array<i64: 64, 128>}, {pipeline_mode = #tpu.pipeline_mode<synchronous>, transform_indices = @transform_5, window_bounds = array<i64: 64, 1>}, {pipeline_mode = #tpu.pipeline_mode<synchronous>, transform_indices = @transform_6, window_bounds = array<i64: 128, 1>}, {transform_indices = @transform_7, window_bounds = array<i64: 1, 1>}, {transform_indices = @transform_8, window_bounds = array<i64: 1, 256>}]} {
    %c0 = arith.constant 0 : index
    %c0_0 = arith.constant 0 : index
    %0 = vector.load %arg1[%c0, %c0_0] : memref<32x256xf32, #tpu.memory_space<vmem>>, vector<32x256xf32>
    %c0_1 = arith.constant 0 : index
    %c0_2 = arith.constant 0 : index
    %1 = vector.load %arg2[%c0_1, %c0_2] : memref<32x256xf32, #tpu.memory_space<vmem>>, vector<32x256xf32>
    %2 = arith.mulf %0, %1 : vector<32x256xf32>
    %c0_3 = arith.constant 0 : index
    %c0_4 = arith.constant 0 : index
    %3 = vector.load %arg3[%c0_3, %c0_4] : memref<128x32xf32, #tpu.memory_space<vmem>>, vector<128x32xf32>
    %cst = arith.constant dense<0.000000e+00> : vector<128x256xf32>
    %4 = tpu.matmul %3, %2, %cst {dimension_numbers = #tpu.dot_dimension_numbers<[1], [0], [0], [1], [0, 0, 1, 1], [], []>} : vector<128x32xf32>, vector<32x256xf32>, vector<128x256xf32> -> vector<128x256xf32>
    %c0_5 = arith.constant 0 : index
    %c0_6 = arith.constant 0 : index
    %5 = vector.load %arg4[%c0_5, %c0_6] : memref<128x1xf32, #tpu.memory_space<vmem>>, vector<128x1xf32>
    %6 = vector.broadcast %5 : vector<128x1xf32> to vector<128x256xf32>
    %7 = arith.addf %4, %6 : vector<128x256xf32>
    %cst_7 = arith.constant 0.000000e+00 : f32
    %8 = vector.broadcast %cst_7 : f32 to vector<128x256xf32>
    %9 = arith.maximumf %7, %8 : vector<128x256xf32>
    %c0_8 = arith.constant 0 : index
    %c0_9 = arith.constant 0 : index
    %10 = vector.load %arg5[%c0_8, %c0_9] : memref<64x128xf32, #tpu.memory_space<vmem>>, vector<64x128xf32>
    %cst_10 = arith.constant dense<0.000000e+00> : vector<64x256xf32>
    %11 = tpu.matmul %10, %9, %cst_10 {dimension_numbers = #tpu.dot_dimension_numbers<[1], [0], [0], [1], [0, 0, 1, 1], [], []>} : vector<64x128xf32>, vector<128x256xf32>, vector<64x256xf32> -> vector<64x256xf32>
    %c0_11 = arith.constant 0 : index
    %c0_12 = arith.constant 0 : index
    %12 = vector.load %arg6[%c0_11, %c0_12] : memref<64x1xf32, #tpu.memory_space<vmem>>, vector<64x1xf32>
    %13 = vector.broadcast %12 : vector<64x1xf32> to vector<64x256xf32>
    %14 = arith.addf %11, %13 : vector<64x256xf32>
    %cst_13 = arith.constant 0.000000e+00 : f32
    %15 = vector.broadcast %cst_13 : f32 to vector<64x256xf32>
    %16 = arith.maximumf %14, %15 : vector<64x256xf32>
    %17 = tpu.concatenate %0, %1, %16 in 0 : vector<32x256xf32>, vector<32x256xf32>, vector<64x256xf32> -> vector<128x256xf32>
    %c0_14 = arith.constant 0 : index
    %c0_15 = arith.constant 0 : index
    %18 = vector.load %arg7[%c0_14, %c0_15] : memref<128x1xf32, #tpu.memory_space<vmem>>, vector<128x1xf32>
    %19 = vector.broadcast %18 : vector<128x1xf32> to vector<128x256xf32>
    %20 = arith.mulf %17, %19 : vector<128x256xf32>
    %cst_16 = arith.constant dense<0.000000e+00> : vector<256xf32>
    %21 = vector.multi_reduction <add>, %20, %cst_16 [0] : vector<128x256xf32> to vector<256xf32>
    %22 = vector.shape_cast %21 : vector<256xf32> to vector<1x256xf32>
    %c0_17 = arith.constant 0 : index
    %c0_18 = arith.constant 0 : index
    %23 = memref.load %arg8[%c0_17, %c0_18] : memref<1x1xf32, #tpu.memory_space<smem>>
    %24 = vector.broadcast %23 : f32 to vector<1x256xf32>
    %25 = arith.addf %22, %24 : vector<1x256xf32>
    %26 = arith.negf %25 : vector<1x256xf32>
    %27 = math.exp %26 : vector<1x256xf32>
    %cst_19 = arith.constant 1.000000e+00 : f32
    %28 = vector.broadcast %cst_19 : f32 to vector<1x256xf32>
    %29 = arith.addf %28, %27 : vector<1x256xf32>
    %30 = arith.divf %28, %29 : vector<1x256xf32>
    %c0_20 = arith.constant 0 : index
    %c0_21 = arith.constant 0 : index
    %31 = vector.load %arg9[%c0_20, %c0_21] : memref<1x256xf32, #tpu.memory_space<vmem>>, vector<1x256xf32>
    tpu.vector_store %arg9[%c0_20, %c0_21], %30 {strides = array<i32>} : memref<1x256xf32, #tpu.memory_space<vmem>>, vector<1x256xf32>,
    return
  }
  func.func @transform_0(%arg0: i32) -> (i32, i32) {
    %c0_i32 = arith.constant 0 : i32
    %c0_i32_0 = arith.constant 0 : i32
    return %c0_i32, %arg0 : i32, i32
  }
  func.func @transform_1(%arg0: i32) -> (i32, i32) {
    %c0_i32 = arith.constant 0 : i32
    %c0_i32_0 = arith.constant 0 : i32
    return %c0_i32, %arg0 : i32, i32
  }
  func.func @transform_2(%arg0: i32) -> (i32, i32) {
    %c0_i32 = arith.constant 0 : i32
    %c0_i32_0 = arith.constant 0 : i32
    %c0_i32_1 = arith.constant 0 : i32
    return %c0_i32, %c0_i32_0 : i32, i32
  }
  func.func @transform_3(%arg0: i32) -> (i32, i32) {
    %c0_i32 = arith.constant 0 : i32
    %c0_i32_0 = arith.constant 0 : i32
    %c0_i32_1 = arith.constant 0 : i32
    return %c0_i32, %c0_i32_0 : i32, i32
  }
  func.func @transform_4(%arg0: i32) -> (i32, i32) {
    %c0_i32 = arith.constant 0 : i32
    %c0_i32_0 = arith.constant 0 : i32
    %c0_i32_1 = arith.constant 0 : i32
    return %c0_i32, %c0_i32_0 : i32, i32
  }
  func.func @transform_5(%arg0: i32) -> (i32, i32) {
    %c0_i32 = arith.constant 0 : i32
    %c0_i32_0 = arith.constant 0 : i32
    %c0_i32_1 = arith.constant 0 : i32
    return %c0_i32, %c0_i32_0 : i32, i32
  }
  func.func @transform_6(%arg0: i32) -> (i32, i32) {
    %c0_i32 = arith.constant 0 : i32
    %c0_i32_0 = arith.constant 0 : i32
    %c0_i32_1 = arith.constant 0 : i32
    return %c0_i32, %c0_i32_0 : i32, i32
  }
  func.func @transform_7(%arg0: i32) -> (i32, i32) {
    %c0_i32 = arith.constant 0 : i32
    %c0_i32_0 = arith.constant 0 : i32
    %c0_i32_1 = arith.constant 0 : i32
    return %c0_i32, %c0_i32_0 : i32, i32
  }
  func.func @transform_8(%arg0: i32) -> (i32, i32) {
    %c0_i32 = arith.constant 0 : i32
    %c0_i32_0 = arith.constant 0 : i32
    return %c0_i32, %arg0 : i32, i32
  }
}

</mosaic_0001>

<llo_original>
// kernel: tpu_custom_call.1
$region0: #{tpu_custom_call.1}
  #allocation0 [shape = 'u32[]', space=smem, size = 0x4, offset = 0x4, fixed_abs, tag = 'smem constant byte address 0x4 - core index']
  #allocation1 [shape = 'u32[144,128]{1,0:T(1,128)}', space=vmem, size = 0x12000, scoped, tag = 'internal scratch']
  #allocation2 [shape = 'f32[1,1]{1,0:T(1,128)S(6)}', space=smem, size = 0x200, scoped, tag = 'scoped memory for tpu_custom_call.1']
  %s0 = inlined_call_operand.vmem [shape: f32[32,256], index: 0, kind: input, shape index: {}]
  %s1 = inlined_call_operand.vmem [shape: f32[32,256], index: 1, kind: input, shape index: {}]
  %s2 = inlined_call_operand.vmem [shape: f32[128,32], index: 2, kind: input, shape index: {}]
  %s3 = inlined_call_operand.vmem [shape: f32[128,1], index: 3, kind: input, shape index: {}]
  %s4 = inlined_call_operand.vmem [shape: f32[64,128], index: 4, kind: input, shape index: {}]
  %s5 = inlined_call_operand.vmem [shape: f32[64,1], index: 5, kind: input, shape index: {}]
  %s6 = inlined_call_operand.vmem [shape: f32[128,1], index: 6, kind: input, shape index: {}]
  %s7 = inlined_call_operand.<no memory space> [shape: f32[1,1], index: 7, kind: input, shape index: {}]
  %s8 = inlined_call_operand.hbm [shape: f32[1,256], index: 8, kind: output, shape index: {}]
  %s9 = sld [smem:[#allocation0]]
  $region42: #{tpu_custom_call.1} parent=0
    _
  %s11 = ssub.s32 1, %s9
  %s12 = scalar_select 0, %s11, %s9
  %13 = sst [smem:[#allocation2]] %s7
  $region1: #{tpu_custom_call.1} parent=0
    #allocation3 [shape = 'u8[1024]{0}', space=vmem, size = 0x400, scoped, tag = 'output window, operand 0, single buffered']
    #allocation4 [shape = 's32[1]{0}', space=sflag, size = 0x4, scoped, tag = 'scoped memory for tpu_custom_call.1']
    %14 = vsyncpa [#allocation4], 0
    // Predicated region
    $region2: #{tpu_custom_call.1} parent=1 // pred_check
      _
    $region3: #{tpu_custom_call.1} parent=1 // pred_check_branch
      %16 = sbr.rel (0) target = $region5
    $region4: #{tpu_custom_call.1} parent=1 // pred_region
      _
    $region5: #{tpu_custom_call.1} parent=1 // pred_fallthru
      _
    // Predicated region
    $region6: #{tpu_custom_call.1} parent=1 // pred_check
      _
    $region7: #{tpu_custom_call.1} parent=1 // pred_check_branch
      %18 = sbr.rel (0) target = $region9
    $region8: #{tpu_custom_call.1} parent=1 // pred_region
      _
    $region9: #{tpu_custom_call.1} parent=1 // pred_fallthru
      _
    // Predicated region
    $region10: #{tpu_custom_call.1} parent=1 // pred_check
      _
    $region11: #{tpu_custom_call.1} parent=1 // pred_check_branch
      %20 = sbr.rel (0) target = $region13
    $region12: #{tpu_custom_call.1} parent=1 // pred_region
      _
    $region13: #{tpu_custom_call.1} parent=1 // pred_fallthru
      _
    // Predicated region
    $region14: #{tpu_custom_call.1} parent=1 // pred_check
      _
    $region15: #{tpu_custom_call.1} parent=1 // pred_check_branch
      %22 = sbr.rel (0) target = $region17
    $region16: #{tpu_custom_call.1} parent=1 // pred_region
      _
    $region17: #{tpu_custom_call.1} parent=1 // pred_fallthru
      _
    // Predicated region
    $region18: #{tpu_custom_call.1} parent=1 // pred_check
      _
    $region19: #{tpu_custom_call.1} parent=1 // pred_check_branch
      %24 = sbr.rel (0) target = $region21
    $region20: #{tpu_custom_call.1} parent=1 // pred_region
      _
    $region21: #{tpu_custom_call.1} parent=1 // pred_fallthru
      _
    // Predicated region
    $region22: #{tpu_custom_call.1} parent=1 // pred_check
      _
    $region23: #{tpu_custom_call.1} parent=1 // pred_check_branch
      %26 = sbr.rel (0) target = $region25
    $region24: #{tpu_custom_call.1} parent=1 // pred_region
      _
    $region25: #{tpu_custom_call.1} parent=1 // pred_fallthru
      _
    // Predicated region
    $region26: #{tpu_custom_call.1} parent=1 // pred_check
      _
    $region27: #{tpu_custom_call.1} parent=1 // pred_check_branch
      %28 = sbr.rel (0) target = $region29
    $region28: #{tpu_custom_call.1} parent=1 // pred_region
      _
    $region29: #{tpu_custom_call.1} parent=1 // pred_fallthru
      _
    // Predicated region
    $region30: #{tpu_custom_call.1} parent=1 // pred_check
      _
    $region31: #{tpu_custom_call.1} parent=1 // pred_check_branch
      %30 = sbr.rel (0) target = $region33
    $region32: #{tpu_custom_call.1} parent=1 // pred_region
      _
    $region33: #{tpu_custom_call.1} parent=1 // pred_fallthru
      _
    %v31 = vld [vmem:[%s0] sm:$0xff]
    %v32 = vld [vmem:[%s0 + $0x8] sm:$0xff]
    %v33 = vld [vmem:[%s0 + $0x10] sm:$0xff]
    %v34 = vld [vmem:[%s0 + $0x18] sm:$0xff]
    %v35 = vld [vmem:[%s0 + $0x20] sm:$0xff]
    %v36 = vld [vmem:[%s0 + $0x28] sm:$0xff]
    %v37 = vld [vmem:[%s0 + $0x30] sm:$0xff]
    %v38 = vld [vmem:[%s0 + $0x38] sm:$0xff]
    %v39 = vld [vmem:[%s1] sm:$0xff]
    %v40 = vld [vmem:[%s1 + $0x8] sm:$0xff]
    %v41 = vld [vmem:[%s1 + $0x10] sm:$0xff]
    %v42 = vld [vmem:[%s1 + $0x18] sm:$0xff]
    %v43 = vld [vmem:[%s1 + $0x20] sm:$0xff]
    %v44 = vld [vmem:[%s1 + $0x28] sm:$0xff]
    %v45 = vld [vmem:[%s1 + $0x30] sm:$0xff]
    %v46 = vld [vmem:[%s1 + $0x38] sm:$0xff]
    %v47 = vmul.f32 %v31, %v39
    %v48 = vmul.f32 %v32, %v40
    %v49 = vmul.f32 %v33, %v41
    %v50 = vmul.f32 %v34, %v42
    %v51 = vmul.f32 %v35, %v43
    %v52 = vmul.f32 %v36, %v44
    %v53 = vmul.f32 %v37, %v45
    %v54 = vmul.f32 %v38, %v46
    %v55 = vld [vmem:[%s2] sm:$0xff]
    %v56 = vld [vmem:[%s2 + $0x8] sm:$0xff]
    %v57 = vld [vmem:[%s2 + $0x10] sm:$0xff]
    %v58 = vld [vmem:[%s2 + $0x18] sm:$0xff]
    %v59 = vld [vmem:[%s2 + $0x20] sm:$0xff]
    %v60 = vld [vmem:[%s2 + $0x28] sm:$0xff]
    %v61 = vld [vmem:[%s2 + $0x30] sm:$0xff]
    %v62 = vld [vmem:[%s2 + $0x38] sm:$0xff]
    %v63 = vld [vmem:[%s2 + $0x40] sm:$0xff]
    %v64 = vld [vmem:[%s2 + $0x48] sm:$0xff]
    %v65 = vld [vmem:[%s2 + $0x50] sm:$0xff]
    %v66 = vld [vmem:[%s2 + $0x58] sm:$0xff]
    %v67 = vld [vmem:[%s2 + $0x60] sm:$0xff]
    %v68 = vld [vmem:[%s2 + $0x68] sm:$0xff]
    %v69 = vld [vmem:[%s2 + $0x70] sm:$0xff]
    %v70 = vld [vmem:[%s2 + $0x78] sm:$0xff]
    %v71 = vld [vmem:[%s3] sm:$0xff]
    %v72 = vld [vmem:[%s3 + $0x8] sm:$0xff]
    %v73 = vld [vmem:[%s3 + $0x10] sm:$0xff]
    %v74 = vld [vmem:[%s3 + $0x18] sm:$0xff]
    %v75 = vld [vmem:[%s3 + $0x20] sm:$0xff]
    %v76 = vld [vmem:[%s3 + $0x28] sm:$0xff]
    %v77 = vld [vmem:[%s3 + $0x30] sm:$0xff]
    %v78 = vld [vmem:[%s3 + $0x38] sm:$0xff]
    %v79 = vld [vmem:[%s3 + $0x40] sm:$0xff]
    %v80 = vld [vmem:[%s3 + $0x48] sm:$0xff]
    %v81 = vld [vmem:[%s3 + $0x50] sm:$0xff]
    %v82 = vld [vmem:[%s3 + $0x58] sm:$0xff]
    %v83 = vld [vmem:[%s3 + $0x60] sm:$0xff]
    %v84 = vld [vmem:[%s3 + $0x68] sm:$0xff]
    %v85 = vld [vmem:[%s3 + $0x70] sm:$0xff]
    %v86 = vld [vmem:[%s3 + $0x78] sm:$0xff]
    %88 = vset.pattern.permute.xlu0 0
    %89 = vperm.xlu0 %88, %v71
    %v90 = vpop.permute.xlu0 %89
    %93 = vset.pattern.permute.xlu0 0
    %94 = vperm.xlu0 %93, %v72
    %v95 = vpop.permute.xlu0 %94
    %98 = vset.pattern.permute.xlu0 0
    %99 = vperm.xlu0 %98, %v73
    %v100 = vpop.permute.xlu0 %99
    %103 = vset.pattern.permute.xlu0 0
    %104 = vperm.xlu0 %103, %v74
    %v105 = vpop.permute.xlu0 %104
    %108 = vset.pattern.permute.xlu0 0
    %109 = vperm.xlu0 %108, %v75
    %v110 = vpop.permute.xlu0 %109
    %113 = vset.pattern.permute.xlu0 0
    %114 = vperm.xlu0 %113, %v76
    %v115 = vpop.permute.xlu0 %114
    %118 = vset.pattern.permute.xlu0 0
    %119 = vperm.xlu0 %118, %v77
    %v120 = vpop.permute.xlu0 %119
    %123 = vset.pattern.permute.xlu0 0
    %124 = vperm.xlu0 %123, %v78
    %v125 = vpop.permute.xlu0 %124
    %128 = vset.pattern.permute.xlu0 0
    %129 = vperm.xlu0 %128, %v79
    %v130 = vpop.permute.xlu0 %129
    %133 = vset.pattern.permute.xlu0 0
    %134 = vperm.xlu0 %133, %v80
    %v135 = vpop.permute.xlu0 %134
    %138 = vset.pattern.permute.xlu0 0
    %139 = vperm.xlu0 %138, %v81
    %v140 = vpop.permute.xlu0 %139
    %143 = vset.pattern.permute.xlu0 0
    %144 = vperm.xlu0 %143, %v82
    %v145 = vpop.permute.xlu0 %144
    %148 = vset.pattern.permute.xlu0 0
    %149 = vperm.xlu0 %148, %v83
    %v150 = vpop.permute.xlu0 %149
    %153 = vset.pattern.permute.xlu0 0
    %154 = vperm.xlu0 %153, %v84
    %v155 = vpop.permute.xlu0 %154
    %158 = vset.pattern.permute.xlu0 0
    %159 = vperm.xlu0 %158, %v85
    %v160 = vpop.permute.xlu0 %159
    %163 = vset.pattern.permute.xlu0 0
    %164 = vperm.xlu0 %163, %v86
    %v165 = vpop.permute.xlu0 %164
    %vm167 = vcmask 261120
    %v169 = vsel %vm167, %v55, 0
    %v172 = vsel %vm167, %v56, 0
    %v175 = vsel %vm167, %v57, 0
    %v178 = vsel %vm167, %v58, 0
    %v181 = vsel %vm167, %v59, 0
    %v184 = vsel %vm167, %v60, 0
    %v187 = vsel %vm167, %v61, 0
    %v190 = vsel %vm167, %v62, 0
    %v193 = vsel %vm167, %v63, 0
    %v196 = vsel %vm167, %v64, 0
    %v199 = vsel %vm167, %v65, 0
    %v202 = vsel %vm167, %v66, 0
    %v205 = vsel %vm167, %v67, 0
    %v208 = vsel %vm167, %v68, 0
    %v211 = vsel %vm167, %v69, 0
    %v214 = vsel %vm167, %v70, 0
    %216 = vmatprep.subr.mxu0 0.0
    %217 = vmatpush1.msra.mxu0 0.0
    %218 = vmatprep.subr.mxu0 0.0
    %219 = vmatpush1.msra.mxu0 0.0
    %220 = vmatprep.subr.mxu0 0.0
    %221 = vmatpush1.msra.mxu0 0.0
    %222 = vmatprep.subr.mxu0 0.0
    %223 = vmatpush1.msra.mxu0 0.0
    %224 = vmatprep.subr.mxu0 0.0
    %225 = vmatpush1.msra.mxu0 0.0
    %226 = vmatprep.subr.mxu0 0.0
    %227 = vmatpush1.msra.mxu0 0.0
    %228 = vmatprep.subr.mxu0 0.0
    %229 = vmatpush1.msra.mxu0 0.0
    %230 = vmatprep.subr.mxu0 0.0
    %231 = vmatpush1.msra.mxu0 0.0
    %232 = vmatprep.subr.mxu0 0.0
    %233 = vmatpush1.msra.mxu0 0.0
    %234 = vmatprep.subr.mxu0 0.0
    %235 = vmatpush1.msra.mxu0 0.0
    %236 = vmatprep.subr.mxu0 0.0
    %237 = vmatpush1.msra.mxu0 0.0
    %238 = vmatprep.subr.mxu0 0.0
    %239 = vmatpush1.msra.mxu0 0.0
    %240 = vmatprep.subr.mxu0 %v54
    %241 = vmatpush1.msra.mxu0 %v53
    %242 = vmatprep.subr.mxu0 %v52
    %243 = vmatpush1.msra.mxu0 %v51
    %244 = vmatprep.subr.mxu0 %v50
    %245 = vmatpush1.msra.mxu0 %v49
    %246 = vmatprep.subr.mxu0 %v48
    %247 = vmatpush1.msra.mxu0 %v47
    %248 = vmatprep.subr.mxu0 0.0
    %249 = vmatpush2.msra.mxu0 0.0
    %250 = vmatprep.subr.mxu0 0.0
    %251 = vmatpush2.msra.mxu0 0.0
    %252 = vmatprep.subr.mxu0 0.0
    %253 = vmatpush2.msra.mxu0 0.0
    %254 = vmatprep.subr.mxu0 0.0
    %255 = vmatpush2.msra.mxu0 0.0
    %256 = vmatprep.subr.mxu0 0.0
    %257 = vmatpush2.msra.mxu0 0.0
    %258 = vmatprep.subr.mxu0 0.0
    %259 = vmatpush2.msra.mxu0 0.0
    %260 = vmatprep.subr.mxu0 0.0
    %261 = vmatpush2.msra.mxu0 0.0
    %262 = vmatprep.subr.mxu0 0.0
    %263 = vmatpush2.msra.mxu0 0.0
    %264 = vmatprep.subr.mxu0 0.0
    %265 = vmatpush2.msra.mxu0 0.0
    %266 = vmatprep.subr.mxu0 0.0
    %267 = vmatpush2.msra.mxu0 0.0
    %268 = vmatprep.subr.mxu0 0.0
    %269 = vmatpush2.msra.mxu0 0.0
    %270 = vmatprep.subr.mxu0 0.0
    %271 = vmatpush2.msra.mxu0 0.0
    %272 = vmatprep.subr.mxu0 0.0
    %273 = vmatpush2.msra.mxu0 0.0
    %274 = vmatprep.subr.mxu0 0.0
    %275 = vmatpush2.msra.mxu0 0.0
    %276 = vmatprep.subr.mxu0 0.0
    %277 = vmatpush2.msra.mxu0 0.0
    %278 = vmatprep.subr.mxu0 0.0
    %279 = vmatpush2.msra.mxu0 0.0
    %280 = vmatprep.mubr.f32.mxu0 0.0
    %281 = vmatmul.mubr.f32.gmra.mxu0 %v169
    %v282 = vpop.f32.mrf.mxu0
    %v283 = vadd.f32 %v90, %v282
    %v284 = vpop.f32.mrf.mxu0
    %v285 = vadd.f32 %v90, %v284
    %286 = vmatprep.mubr.f32.mxu0 0.0
    %287 = vmatmul.mubr.f32.gmra.mxu0 %v172
    %v288 = vpop.f32.mrf.mxu0
    %v289 = vadd.f32 %v95, %v288
    %v290 = vpop.f32.mrf.mxu0
    %v291 = vadd.f32 %v95, %v290
    %292 = vmatprep.mubr.f32.mxu0 0.0
    %293 = vmatmul.mubr.f32.gmra.mxu0 %v175
    %v294 = vpop.f32.mrf.mxu0
    %v295 = vadd.f32 %v100, %v294
    %v296 = vpop.f32.mrf.mxu0
    %v297 = vadd.f32 %v100, %v296
    %298 = vmatprep.mubr.f32.mxu0 0.0
    %299 = vmatmul.mubr.f32.gmra.mxu0 %v178
    %v300 = vpop.f32.mrf.mxu0
    %v301 = vadd.f32 %v105, %v300
    %v302 = vpop.f32.mrf.mxu0
    %v303 = vadd.f32 %v105, %v302
    %304 = vmatprep.mubr.f32.mxu0 0.0
    %305 = vmatmul.mubr.f32.gmra.mxu0 %v181
    %v306 = vpop.f32.mrf.mxu0
    %v307 = vadd.f32 %v110, %v306
    %v308 = vpop.f32.mrf.mxu0
    %v309 = vadd.f32 %v110, %v308
    %310 = vmatprep.mubr.f32.mxu0 0.0
    %311 = vmatmul.mubr.f32.gmra.mxu0 %v184
    %v312 = vpop.f32.mrf.mxu0
    %v313 = vadd.f32 %v115, %v312
    %v314 = vpop.f32.mrf.mxu0
    %v315 = vadd.f32 %v115, %v314
    %316 = vmatprep.mubr.f32.mxu0 0.0
    %317 = vmatmul.mubr.f32.gmra.mxu0 %v187
    %v318 = vpop.f32.mrf.mxu0
    %v319 = vadd.f32 %v120, %v318
    %v320 = vpop.f32.mrf.mxu0
    %v321 = vadd.f32 %v120, %v320
    %322 = vmatprep.mubr.f32.mxu0 0.0
    %323 = vmatmul.mubr.f32.gmra.mxu0 %v190
    %v324 = vpop.f32.mrf.mxu0
    %v325 = vadd.f32 %v125, %v324
    %v326 = vpop.f32.mrf.mxu0
    %v327 = vadd.f32 %v125, %v326
    %328 = vmatprep.mubr.f32.mxu0 0.0
    %329 = vmatmul.mubr.f32.gmra.mxu0 %v193
    %v330 = vpop.f32.mrf.mxu0
    %v331 = vadd.f32 %v130, %v330
    %v332 = vpop.f32.mrf.mxu0
    %v333 = vadd.f32 %v130, %v332
    %334 = vmatprep.mubr.f32.mxu0 0.0
    %335 = vmatmul.mubr.f32.gmra.mxu0 %v196
    %v336 = vpop.f32.mrf.mxu0
    %v337 = vadd.f32 %v135, %v336
    %v338 = vpop.f32.mrf.mxu0
    %v339 = vadd.f32 %v135, %v338
    %340 = vmatprep.mubr.f32.mxu0 0.0
    %341 = vmatmul.mubr.f32.gmra.mxu0 %v199
    %v342 = vpop.f32.mrf.mxu0
    %v343 = vadd.f32 %v140, %v342
    %v344 = vpop.f32.mrf.mxu0
    %v345 = vadd.f32 %v140, %v344
    %346 = vmatprep.mubr.f32.mxu0 0.0
    %347 = vmatmul.mubr.f32.gmra.mxu0 %v202
    %v348 = vpop.f32.mrf.mxu0
    %v349 = vadd.f32 %v145, %v348
    %v350 = vpop.f32.mrf.mxu0
    %v351 = vadd.f32 %v145, %v350
    %352 = vmatprep.mubr.f32.mxu0 0.0
    %353 = vmatmul.mubr.f32.gmra.mxu0 %v205
    %v354 = vpop.f32.mrf.mxu0
    %v355 = vadd.f32 %v150, %v354
    %v356 = vpop.f32.mrf.mxu0
    %v357 = vadd.f32 %v150, %v356
    %358 = vmatprep.mubr.f32.mxu0 0.0
    %359 = vmatmul.mubr.f32.gmra.mxu0 %v208
    %v360 = vpop.f32.mrf.mxu0
    %v361 = vadd.f32 %v155, %v360
    %v362 = vpop.f32.mrf.mxu0
    %v363 = vadd.f32 %v155, %v362
    %364 = vmatprep.mubr.f32.mxu0 0.0
    %365 = vmatmul.mubr.f32.gmra.mxu0 %v211
    %v366 = vpop.f32.mrf.mxu0
    %v367 = vadd.f32 %v160, %v366
    %v368 = vpop.f32.mrf.mxu0
    %v369 = vadd.f32 %v160, %v368
    %370 = vmatprep.mubr.f32.mxu0 0.0
    %371 = vmatmul.mubr.f32.gmra.mxu0 %v214
    %v372 = vpop.f32.mrf.mxu0
    %v373 = vadd.f32 %v165, %v372
    %v374 = vpop.f32.mrf.mxu0
    %v375 = vadd.f32 %v165, %v374
    %376 = vdwg.mxu0
    %v377 = vmax.f32 %v283, 0.0
    %v378 = vmax.f32 %v285, 0.0
    %v379 = vmax.f32 %v289, 0.0
    %v380 = vmax.f32 %v291, 0.0
    %v381 = vmax.f32 %v295, 0.0
    %v382 = vmax.f32 %v297, 0.0
    %v383 = vmax.f32 %v301, 0.0
    %v384 = vmax.f32 %v303, 0.0
    %v385 = vmax.f32 %v307, 0.0
    %v386 = vmax.f32 %v309, 0.0
    %v387 = vmax.f32 %v313, 0.0
    %v388 = vmax.f32 %v315, 0.0
    %v389 = vmax.f32 %v319, 0.0
    %v390 = vmax.f32 %v321, 0.0
    %v391 = vmax.f32 %v325, 0.0
    %v392 = vmax.f32 %v327, 0.0
    %v393 = vmax.f32 %v331, 0.0
    %v394 = vmax.f32 %v333, 0.0
    %v395 = vmax.f32 %v337, 0.0
    %v396 = vmax.f32 %v339, 0.0
    %v397 = vmax.f32 %v343, 0.0
    %v398 = vmax.f32 %v345, 0.0
    %v399 = vmax.f32 %v349, 0.0
    %v400 = vmax.f32 %v351, 0.0
    %v401 = vmax.f32 %v355, 0.0
    %v402 = vmax.f32 %v357, 0.0
    %v403 = vmax.f32 %v361, 0.0
    %v404 = vmax.f32 %v363, 0.0
    %v405 = vmax.f32 %v367, 0.0
    %v406 = vmax.f32 %v369, 0.0
    %v407 = vmax.f32 %v373, 0.0
    %v408 = vmax.f32 %v375, 0.0
    %v409 = vld [vmem:[%s4] sm:$0xff]
    %v410 = vld [vmem:[%s4 + $0x8] sm:$0xff]
    %v411 = vld [vmem:[%s4 + $0x10] sm:$0xff]
    %v412 = vld [vmem:[%s4 + $0x18] sm:$0xff]
    %v413 = vld [vmem:[%s4 + $0x20] sm:$0xff]
    %v414 = vld [vmem:[%s4 + $0x28] sm:$0xff]
    %v415 = vld [vmem:[%s4 + $0x30] sm:$0xff]
    %v416 = vld [vmem:[%s4 + $0x38] sm:$0xff]
    %v417 = vld [vmem:[%s5] sm:$0xff]
    %v418 = vld [vmem:[%s5 + $0x8] sm:$0xff]
    %v419 = vld [vmem:[%s5 + $0x10] sm:$0xff]
    %v420 = vld [vmem:[%s5 + $0x18] sm:$0xff]
    %v421 = vld [vmem:[%s5 + $0x20] sm:$0xff]
    %v422 = vld [vmem:[%s5 + $0x28] sm:$0xff]
    %v423 = vld [vmem:[%s5 + $0x30] sm:$0xff]
    %v424 = vld [vmem:[%s5 + $0x38] sm:$0xff]
    %426 = vset.pattern.permute.xlu0 0
    %427 = vperm.xlu0 %426, %v417
    %v428 = vpop.permute.xlu0 %427
    %431 = vset.pattern.permute.xlu0 0
    %432 = vperm.xlu0 %431, %v418
    %v433 = vpop.permute.xlu0 %432
    %436 = vset.pattern.permute.xlu0 0
    %437 = vperm.xlu0 %436, %v419
    %v438 = vpop.permute.xlu0 %437
    %441 = vset.pattern.permute.xlu0 0
    %442 = vperm.xlu0 %441, %v420
    %v443 = vpop.permute.xlu0 %442
    %446 = vset.pattern.permute.xlu0 0
    %447 = vperm.xlu0 %446, %v421
    %v448 = vpop.permute.xlu0 %447
    %451 = vset.pattern.permute.xlu0 0
    %452 = vperm.xlu0 %451, %v422
    %v453 = vpop.permute.xlu0 %452
    %456 = vset.pattern.permute.xlu0 0
    %457 = vperm.xlu0 %456, %v423
    %v458 = vpop.permute.xlu0 %457
    %461 = vset.pattern.permute.xlu0 0
    %462 = vperm.xlu0 %461, %v424
    %v463 = vpop.permute.xlu0 %462
    %465 = vmatprep.subr.mxu0 %v408
    %466 = vmatpush1.msra.mxu0 %v407
    %467 = vmatprep.subr.mxu0 %v406
    %468 = vmatpush1.msra.mxu0 %v405
    %469 = vmatprep.subr.mxu0 %v404
    %470 = vmatpush1.msra.mxu0 %v403
    %471 = vmatprep.subr.mxu0 %v402
    %472 = vmatpush1.msra.mxu0 %v401
    %473 = vmatprep.subr.mxu0 %v400
    %474 = vmatpush1.msra.mxu0 %v399
    %475 = vmatprep.subr.mxu0 %v398
    %476 = vmatpush1.msra.mxu0 %v397
    %477 = vmatprep.subr.mxu0 %v396
    %478 = vmatpush1.msra.mxu0 %v395
    %479 = vmatprep.subr.mxu0 %v394
    %480 = vmatpush1.msra.mxu0 %v393
    %481 = vmatprep.subr.mxu0 %v392
    %482 = vmatpush1.msra.mxu0 %v391
    %483 = vmatprep.subr.mxu0 %v390
    %484 = vmatpush1.msra.mxu0 %v389
    %485 = vmatprep.subr.mxu0 %v388
    %486 = vmatpush1.msra.mxu0 %v387
    %487 = vmatprep.subr.mxu0 %v386
    %488 = vmatpush1.msra.mxu0 %v385
    %489 = vmatprep.subr.mxu0 %v384
    %490 = vmatpush1.msra.mxu0 %v383
    %491 = vmatprep.subr.mxu0 %v382
    %492 = vmatpush1.msra.mxu0 %v381
    %493 = vmatprep.subr.mxu0 %v380
    %494 = vmatpush1.msra.mxu0 %v379
    %495 = vmatprep.subr.mxu0 %v378
    %496 = vmatpush1.msra.mxu0 %v377
    %497 = vmatprep.subr.mxu0 0.0
    %498 = vmatpush2.msra.mxu0 0.0
    %499 = vmatprep.subr.mxu0 0.0
    %500 = vmatpush2.msra.mxu0 0.0
    %501 = vmatprep.subr.mxu0 0.0
    %502 = vmatpush2.msra.mxu0 0.0
    %503 = vmatprep.subr.mxu0 0.0
    %504 = vmatpush2.msra.mxu0 0.0
    %505 = vmatprep.subr.mxu0 0.0
    %506 = vmatpush2.msra.mxu0 0.0
    %507 = vmatprep.subr.mxu0 0.0
    %508 = vmatpush2.msra.mxu0 0.0
    %509 = vmatprep.subr.mxu0 0.0
    %510 = vmatpush2.msra.mxu0 0.0
    %511 = vmatprep.subr.mxu0 0.0
    %512 = vmatpush2.msra.mxu0 0.0
    %513 = vmatprep.subr.mxu0 0.0
    %514 = vmatpush2.msra.mxu0 0.0
    %515 = vmatprep.subr.mxu0 0.0
    %516 = vmatpush2.msra.mxu0 0.0
    %517 = vmatprep.subr.mxu0 0.0
    %518 = vmatpush2.msra.mxu0 0.0
    %519 = vmatprep.subr.mxu0 0.0
    %520 = vmatpush2.msra.mxu0 0.0
    %521 = vmatprep.subr.mxu0 0.0
    %522 = vmatpush2.msra.mxu0 0.0
    %523 = vmatprep.subr.mxu0 0.0
    %524 = vmatpush2.msra.mxu0 0.0
    %525 = vmatprep.subr.mxu0 0.0
    %526 = vmatpush2.msra.mxu0 0.0
    %527 = vmatprep.subr.mxu0 0.0
    %528 = vmatpush2.msra.mxu0 0.0
    %529 = vmatprep.mubr.f32.mxu0 0.0
    %530 = vmatmul.mubr.f32.gmra.mxu0 %v409
    %v531 = vpop.f32.mrf.mxu0
    %v532 = vadd.f32 %v428, %v531
    %v533 = vpop.f32.mrf.mxu0
    %v534 = vadd.f32 %v428, %v533
    %535 = vmatprep.mubr.f32.mxu0 0.0
    %536 = vmatmul.mubr.f32.gmra.mxu0 %v410
    %v537 = vpop.f32.mrf.mxu0
    %v538 = vadd.f32 %v433, %v537
    %v539 = vpop.f32.mrf.mxu0
    %v540 = vadd.f32 %v433, %v539
    %541 = vmatprep.mubr.f32.mxu0 0.0
    %542 = vmatmul.mubr.f32.gmra.mxu0 %v411
    %v543 = vpop.f32.mrf.mxu0
    %v544 = vadd.f32 %v438, %v543
    %v545 = vpop.f32.mrf.mxu0
    %v546 = vadd.f32 %v438, %v545
    %547 = vmatprep.mubr.f32.mxu0 0.0
    %548 = vmatmul.mubr.f32.gmra.mxu0 %v412
    %v549 = vpop.f32.mrf.mxu0
    %v550 = vadd.f32 %v443, %v549
    %v551 = vpop.f32.mrf.mxu0
    %v552 = vadd.f32 %v443, %v551
    %553 = vmatprep.mubr.f32.mxu0 0.0
    %554 = vmatmul.mubr.f32.gmra.mxu0 %v413
    %v555 = vpop.f32.mrf.mxu0
    %v556 = vadd.f32 %v448, %v555
    %v557 = vpop.f32.mrf.mxu0
    %v558 = vadd.f32 %v448, %v557
    %559 = vmatprep.mubr.f32.mxu0 0.0
    %560 = vmatmul.mubr.f32.gmra.mxu0 %v414
    %v561 = vpop.f32.mrf.mxu0
    %v562 = vadd.f32 %v453, %v561
    %v563 = vpop.f32.mrf.mxu0
    %v564 = vadd.f32 %v453, %v563
    %565 = vmatprep.mubr.f32.mxu0 0.0
    %566 = vmatmul.mubr.f32.gmra.mxu0 %v415
    %v567 = vpop.f32.mrf.mxu0
    %v568 = vadd.f32 %v458, %v567
    %v569 = vpop.f32.mrf.mxu0
    %v570 = vadd.f32 %v458, %v569
    %571 = vmatprep.mubr.f32.mxu0 0.0
    %572 = vmatmul.mubr.f32.gmra.mxu0 %v416
    %v573 = vpop.f32.mrf.mxu0
    %v574 = vadd.f32 %v463, %v573
    %v575 = vpop.f32.mrf.mxu0
    %v576 = vadd.f32 %v463, %v575
    %577 = vdwg.mxu0
    %v578 = vmax.f32 %v532, 0.0
    %v579 = vmax.f32 %v534, 0.0
    %v580 = vmax.f32 %v538, 0.0
    %v581 = vmax.f32 %v540, 0.0
    %v582 = vmax.f32 %v544, 0.0
    %v583 = vmax.f32 %v546, 0.0
    %v584 = vmax.f32 %v550, 0.0
    %v585 = vmax.f32 %v552, 0.0
    %v586 = vmax.f32 %v556, 0.0
    %v587 = vmax.f32 %v558, 0.0
    %v588 = vmax.f32 %v562, 0.0
    %v589 = vmax.f32 %v564, 0.0
    %v590 = vmax.f32 %v568, 0.0
    %v591 = vmax.f32 %v570, 0.0
    %v592 = vmax.f32 %v574, 0.0
    %v593 = vmax.f32 %v576, 0.0
    %v594 = vld [vmem:[%s6] sm:$0xff]
    %v595 = vld [vmem:[%s6 + $0x8] sm:$0xff]
    %v596 = vld [vmem:[%s6 + $0x10] sm:$0xff]
    %v597 = vld [vmem:[%s6 + $0x18] sm:$0xff]
    %v598 = vld [vmem:[%s6 + $0x20] sm:$0xff]
    %v599 = vld [vmem:[%s6 + $0x28] sm:$0xff]
    %v600 = vld [vmem:[%s6 + $0x30] sm:$0xff]
    %v601 = vld [vmem:[%s6 + $0x38] sm:$0xff]
    %v602 = vld [vmem:[%s6 + $0x40] sm:$0xff]
    %v603 = vld [vmem:[%s6 + $0x48] sm:$0xff]
    %v604 = vld [vmem:[%s6 + $0x50] sm:$0xff]
    %v605 = vld [vmem:[%s6 + $0x58] sm:$0xff]
    %v606 = vld [vmem:[%s6 + $0x60] sm:$0xff]
    %v607 = vld [vmem:[%s6 + $0x68] sm:$0xff]
    %v608 = vld [vmem:[%s6 + $0x70] sm:$0xff]
    %v609 = vld [vmem:[%s6 + $0x78] sm:$0xff]
    %611 = vset.pattern.permute.xlu0 0
    %612 = vperm.xlu0 %611, %v594
    %v613 = vpop.permute.xlu0 %612
    %616 = vset.pattern.permute.xlu0 0
    %617 = vperm.xlu0 %616, %v595
    %v618 = vpop.permute.xlu0 %617
    %621 = vset.pattern.permute.xlu0 0
    %622 = vperm.xlu0 %621, %v596
    %v623 = vpop.permute.xlu0 %622
    %626 = vset.pattern.permute.xlu0 0
    %627 = vperm.xlu0 %626, %v597
    %v628 = vpop.permute.xlu0 %627
    %631 = vset.pattern.permute.xlu0 0
    %632 = vperm.xlu0 %631, %v598
    %v633 = vpop.permute.xlu0 %632
    %636 = vset.pattern.permute.xlu0 0
    %637 = vperm.xlu0 %636, %v599
    %v638 = vpop.permute.xlu0 %637
    %641 = vset.pattern.permute.xlu0 0
    %642 = vperm.xlu0 %641, %v600
    %v643 = vpop.permute.xlu0 %642
    %646 = vset.pattern.permute.xlu0 0
    %647 = vperm.xlu0 %646, %v601
    %v648 = vpop.permute.xlu0 %647
    %651 = vset.pattern.permute.xlu0 0
    %652 = vperm.xlu0 %651, %v602
    %v653 = vpop.permute.xlu0 %652
    %656 = vset.pattern.permute.xlu0 0
    %657 = vperm.xlu0 %656, %v603
    %v658 = vpop.permute.xlu0 %657
    %661 = vset.pattern.permute.xlu0 0
    %662 = vperm.xlu0 %661, %v604
    %v663 = vpop.permute.xlu0 %662
    %666 = vset.pattern.permute.xlu0 0
    %667 = vperm.xlu0 %666, %v605
    %v668 = vpop.permute.xlu0 %667
    %671 = vset.pattern.permute.xlu0 0
    %672 = vperm.xlu0 %671, %v606
    %v673 = vpop.permute.xlu0 %672
    %676 = vset.pattern.permute.xlu0 0
    %677 = vperm.xlu0 %676, %v607
    %v678 = vpop.permute.xlu0 %677
    %681 = vset.pattern.permute.xlu0 0
    %682 = vperm.xlu0 %681, %v608
    %v683 = vpop.permute.xlu0 %682
    %686 = vset.pattern.permute.xlu0 0
    %687 = vperm.xlu0 %686, %v609
    %v688 = vpop.permute.xlu0 %687
    %v690 = vmul.f32 %v31, %v613
    %v691 = vmul.f32 %v32, %v613
    %v692 = vmul.f32 %v33, %v618
    %v693 = vmul.f32 %v34, %v618
    %v694 = vmul.f32 %v35, %v623
    %v695 = vmul.f32 %v36, %v623
    %v696 = vmul.f32 %v37, %v628
    %v697 = vmul.f32 %v38, %v628
    %v698 = vmul.f32 %v39, %v633
    %v699 = vmul.f32 %v40, %v633
    %v700 = vmul.f32 %v41, %v638
    %v701 = vmul.f32 %v42, %v638
    %v702 = vmul.f32 %v43, %v643
    %v703 = vmul.f32 %v44, %v643
    %v704 = vmul.f32 %v45, %v648
    %v705 = vmul.f32 %v46, %v648
    %v706 = vmul.f32 %v578, %v653
    %v707 = vmul.f32 %v579, %v653
    %v708 = vmul.f32 %v580, %v658
    %v709 = vmul.f32 %v581, %v658
    %v710 = vmul.f32 %v582, %v663
    %v711 = vmul.f32 %v583, %v663
    %v712 = vmul.f32 %v584, %v668
    %v713 = vmul.f32 %v585, %v668
    %v714 = vmul.f32 %v586, %v673
    %v715 = vmul.f32 %v587, %v673
    %v716 = vmul.f32 %v588, %v678
    %v717 = vmul.f32 %v589, %v678
    %v718 = vmul.f32 %v590, %v683
    %v719 = vmul.f32 %v591, %v683
    %v720 = vmul.f32 %v592, %v688
    %v721 = vmul.f32 %v593, %v688
    %v722 = vadd.f32 %v690, %v692
    %v723 = vadd.f32 %v722, %v694
    %v724 = vadd.f32 %v723, %v696
    %v725 = vadd.f32 %v724, %v698
    %v726 = vadd.f32 %v725, %v700
    %v727 = vadd.f32 %v726, %v702
    %v728 = vadd.f32 %v727, %v704
    %v729 = vadd.f32 %v728, %v706
    %v730 = vadd.f32 %v729, %v708
    %v731 = vadd.f32 %v730, %v710
    %v732 = vadd.f32 %v731, %v712
    %v733 = vadd.f32 %v732, %v714
    %v734 = vadd.f32 %v733, %v716
    %v735 = vadd.f32 %v734, %v718
    %v736 = vadd.f32 %v735, %v720
    %v737 = vrot.slane %v736, 4
    %v738 = vadd.f32 %v736, %v737
    %v739 = vrot.slane %v738, 2
    %v740 = vadd.f32 %v738, %v739
    %v741 = vrot.slane %v740, 1
    %v742 = vadd.f32 %v740, %v741
    %v743 = vadd.f32 %v691, %v693
    %v744 = vadd.f32 %v743, %v695
    %v745 = vadd.f32 %v744, %v697
    %v746 = vadd.f32 %v745, %v699
    %v747 = vadd.f32 %v746, %v701
    %v748 = vadd.f32 %v747, %v703
    %v749 = vadd.f32 %v748, %v705
    %v750 = vadd.f32 %v749, %v707
    %v751 = vadd.f32 %v750, %v709
    %v752 = vadd.f32 %v751, %v711
    %v753 = vadd.f32 %v752, %v713
    %v754 = vadd.f32 %v753, %v715
    %v755 = vadd.f32 %v754, %v717
    %v756 = vadd.f32 %v755, %v719
    %v757 = vadd.f32 %v756, %v721
    %v758 = vrot.slane %v757, 4
    %v759 = vadd.f32 %v757, %v758
    %v760 = vrot.slane %v759, 2
    %v761 = vadd.f32 %v759, %v760
    %v762 = vrot.slane %v761, 1
    %v763 = vadd.f32 %v761, %v762
    %s764 = sld [smem:[#allocation2]]
    %v765 = vstv %s764
    %v766 = vadd.f32 %v742, %v765
    %v767 = vadd.f32 %v763, %v765
    %v768 = vxor.u32 %v766, 2147483648
    %v769 = vxor.u32 %v767, 2147483648
    %v770 = vmul.f32 %v768, 1.442695
    %v771 = vpow.pop %v770
    %v772 = vmul.f32 %v769, 1.442695
    %v773 = vpow.pop %v772
    %v774 = vadd.f32 %v771, 1.0
    %v775 = vadd.f32 %v773, 1.0
    %v776 = vrcp.pop %v774
    %v777 = vmul.f32 1.0, %v776
    %v778 = vrcp.pop %v775
    %v779 = vmul.f32 1.0, %v778
    %v782 = vcombine.low %v777, %v779
    %v784 = vunpack.c.l.s4 1966171168
    %v785 = vunpack.c.0.s8 %v784
    %v786 = vlaneseq
    %v787 = vshrl.u32 %v786, 7
    %v788 = vsub.s32 %v785, %v787
    %v789 = vrot.slane %v782, %v788
    %v791 = vunpack.c.l.s4 1966171168
    %v792 = vunpack.c.0.s8 %v791
    %v793 = vlaneseq
    %v794 = vshrl.u32 %v793, 7
    %v795 = vsub.s32 %v792, %v794
    %v796 = vrot.slane %v789, %v795
    %v798 = vlaneseq
    %vm799 = vcmp.ge.s32.totalorder %v798, 0
    %vm800 = vcmp.lt.s32.totalorder %v798, 256
    %vm801 = vmand %vm799, %vm800
    %802 = vst.msk [vmem:[#allocation3] sm:$0x3] %vm801, %v796
    // Predicated region
    $region34: #{tpu_custom_call.1} parent=1 // pred_check
      _
    $region35: #{tpu_custom_call.1} parent=1 // pred_check_branch
      %804 = sbr.rel (0) target = $region37
    $region36: #{tpu_custom_call.1} parent=1 // pred_region
      %s806 = ssub.s32 32, 32
      %807 = vsyncadd [#allocation4], %s806
      %s809 = sshll.u32 [#allocation3], 4
      %s810 = int_to_ptr.vmem [resolvable:$true] %s809
      %812 = dma.vmem_to_hbm [thread:$0]  %s810, 32, %s8, [#allocation4]
    $region37: #{tpu_custom_call.1} parent=1 // pred_fallthru
      _
    // Predicated region
    $region38: #{tpu_custom_call.1} parent=1 // pred_check
      _
    $region39: #{tpu_custom_call.1} parent=1 // pred_check_branch
      %814 = sbr.rel (0) target = $region41
    $region40: #{tpu_custom_call.1} parent=1 // pred_region
      %815 = dma.done [#allocation4], 32
    $region41: #{tpu_custom_call.1} parent=1 // pred_fallthru
      _
    %816 = vsyncpa [#allocation4], 1

</llo_original>
